<compile_context>
chip_gen: v6e
topology: v6e:2x2x1
jax: 0.10.0
libtpu: 0.0.40
codegen_flags: <defaults>
</compile_context>

<pallas_src>
import functools

import jax
import jax.numpy as jnp
from jax.experimental import pallas as pl
from jax.experimental.pallas import tpu as pltpu


def _round_up(x, m):
    return ((x + m - 1) // m) * m


def residual_add_kernel(x_ref, w_ref, b_ref, o_ref):
    # x_ref: (tm, Dp) f32, w_ref: (Dp, Dp) bf16, b_ref: (1, Dp) f32, o_ref: (tm, Dp)
    x = x_ref[...]
    fn_x = jnp.dot(x.astype(jnp.bfloat16), w_ref[...],
                   preferred_element_type=jnp.float32)
    # Bias + residual in f32; single cast at the store (cheapest on v5e too).
    o_ref[...] = (fn_x + b_ref[...] + x).astype(o_ref.dtype)


@functools.partial(jax.jit, static_argnames=("tm",))
def residual_add(x, w, b, *, tm=512):
    """x: (B, S, D) f32; w: (D, D); b: (D,).  Returns x @ w + b + x."""
    B, S, D = x.shape
    M = B * S

    # Lane-dense feature dim (multiple of 128) and tile-aligned row count.
    Dp = _round_up(D, 128)
    tm_eff = min(tm, _round_up(M, 8))          # don't blow up tiny inputs
    Mp = _round_up(M, tm_eff)

    x2 = jnp.zeros((Mp, Dp), x.dtype).at[:M, :D].set(x.reshape(M, D))
    # bf16 weight: 2x MXU operand throughput, half the resident VMEM footprint.
    w2 = jnp.zeros((Dp, Dp), jnp.bfloat16).at[:D, :D].set(w.astype(jnp.bfloat16))
    b2 = jnp.zeros((1, Dp), jnp.float32).at[0, :D].set(b.astype(jnp.float32))

    grid = (Mp // tm_eff,)

    # Working set: double-buffered x + out tiles (f32), resident bf16 weight
    # (conservatively counted as double-buffered) and bias, plus headroom.
    vmem_bytes = (2 * tm_eff * Dp * 4          # x tiles
                  + 2 * tm_eff * Dp * 4        # out tiles
                  + 2 * Dp * Dp * 2            # weight
                  + 2 * Dp * 4)                # bias
    vmem_limit = max(int(vmem_bytes * 1.5) + (4 << 20), 32 << 20)
    vmem_limit = min(vmem_limit, 48 << 20)     # stay inside v7x's 64 MiB VMEM
    # TODO(synk): for very large D (>= ~2048 f32) tile the weight over an
    # N-grid axis (and K with an accumulator) instead of keeping it resident.

    out = pl.pallas_call(
        residual_add_kernel,
        out_shape=jax.ShapeDtypeStruct((Mp, Dp), x.dtype),
        grid_spec=pltpu.PrefetchScalarGridSpec(
            num_scalar_prefetch=0,
            grid=grid,
            in_specs=[
                pl.BlockSpec((tm_eff, Dp), lambda i: (i, 0)),   # x tile
                pl.BlockSpec((Dp, Dp), lambda i: (0, 0)),       # weight, resident
                pl.BlockSpec((1, Dp), lambda i: (0, 0)),        # bias, resident
            ],
            out_specs=pl.BlockSpec((tm_eff, Dp), lambda i: (i, 0)),
        ),
        compiler_params=pltpu.CompilerParams(
            dimension_semantics=("parallel",),   # v7x: two TCs split the rows
            vmem_limit_bytes=vmem_limit,
        ),
    )(x2, w2, b2)

    return out[:M, :D].reshape(B, S, D)


if __name__ == "__main__":
    key = jax.random.PRNGKey(0)
    kx, kw, kb = jax.random.split(key, 3)

    B, S, D = 2, 8, 32
    x = jax.random.normal(kx, (B, S, D), dtype=jnp.float32)
    # Deterministic synthetic parameters for fn = Linear(D, D)
    w = jax.random.normal(kw, (D, D), dtype=jnp.float32) * 0.05
    b = jax.random.normal(kb, (D,), dtype=jnp.float32) * 0.01

    out = jax.block_until_ready(residual_add(x, w, b))

    # Reference with the same bf16-operand / f32-accumulate matmul precision.
    ref_fn = jnp.einsum(
        "bsd,de->bse",
        x.astype(jnp.bfloat16), w.astype(jnp.bfloat16),
        preferred_element_type=jnp.float32,
    )
    ref = ref_fn + b + x
    assert jnp.allclose(out, ref, atol=1e-4, rtol=1e-4), "mismatch vs bf16 reference"

    # Sanity check vs full-f32 reference (only bf16 matmul rounding differs).
    ref_f32 = jnp.einsum("bsd,de->bse", x, w) + b + x
    assert jnp.allclose(out, ref_f32, atol=5e-2, rtol=5e-2), "drift vs f32 reference"

    print("KERNEL_OK")
</pallas_src>

<mosaic_0001>
module attributes {stable_mosaic.version = 11 : i64} {
  func.func @residual_add_kernel(%arg0: i32, %arg1: memref<16x128xf32, #tpu.memory_space<vmem>>, %arg2: memref<128x128xbf16, #tpu.memory_space<vmem>>, %arg3: memref<1x128xf32, #tpu.memory_space<vmem>>, %arg4: memref<16x128xf32, #tpu.memory_space<vmem>>) attributes {dimension_semantics = [#tpu.dimension_semantics<parallel>], iteration_bounds = array<i64: 1>, scalar_prefetch = 0 : i64, scratch_operands = 0 : i64, tpu.core_type = #tpu.core_type<tc>, window_params = [{transform_indices = @transform_0, window_bounds = array<i64: 16, 128>}, {pipeline_mode = #tpu.pipeline_mode<synchronous>, transform_indices = @transform_1, window_bounds = array<i64: 128, 128>}, {pipeline_mode = #tpu.pipeline_mode<synchronous>, transform_indices = @transform_2, window_bounds = array<i64: 1, 128>}, {transform_indices = @transform_3, window_bounds = array<i64: 16, 128>}]} {
    %c0 = arith.constant 0 : index
    %c0_0 = arith.constant 0 : index
    %0 = vector.load %arg1[%c0, %c0_0] : memref<16x128xf32, #tpu.memory_space<vmem>>, vector<16x128xf32>
    %1 = arith.truncf %0 : vector<16x128xf32> to vector<16x128xbf16>
    %c0_1 = arith.constant 0 : index
    %c0_2 = arith.constant 0 : index
    %2 = vector.load %arg2[%c0_1, %c0_2] : memref<128x128xbf16, #tpu.memory_space<vmem>>, vector<128x128xbf16>
    %cst = arith.constant dense<0.000000e+00> : vector<16x128xf32>
    %3 = tpu.matmul %1, %2, %cst {dimension_numbers = #tpu.dot_dimension_numbers<[1], [0], [0], [1], [0, 0, 1, 1], [], []>} : vector<16x128xbf16>, vector<128x128xbf16>, vector<16x128xf32> -> vector<16x128xf32>
    %c0_3 = arith.constant 0 : index
    %c0_4 = arith.constant 0 : index
    %4 = vector.load %arg3[%c0_3, %c0_4] : memref<1x128xf32, #tpu.memory_space<vmem>>, vector<1x128xf32>
    %5 = vector.broadcast %4 : vector<1x128xf32> to vector<16x128xf32>
    %6 = arith.addf %3, %5 : vector<16x128xf32>
    %7 = arith.addf %6, %0 : vector<16x128xf32>
    %c0_5 = arith.constant 0 : index
    %c0_6 = arith.constant 0 : index
    %8 = vector.load %arg4[%c0_5, %c0_6] : memref<16x128xf32, #tpu.memory_space<vmem>>, vector<16x128xf32>
    tpu.vector_store %arg4[%c0_5, %c0_6], %7 {strides = array<i32>} : memref<16x128xf32, #tpu.memory_space<vmem>>, vector<16x128xf32>,
    return
  }
  func.func @transform_0(%arg0: i32) -> (i32, i32) {
    %c0_i32 = arith.constant 0 : i32
    %c0_i32_0 = arith.constant 0 : i32
    return %arg0, %c0_i32 : i32, i32
  }
  func.func @transform_1(%arg0: i32) -> (i32, i32) {
    %c0_i32 = arith.constant 0 : i32
    %c0_i32_0 = arith.constant 0 : i32
    %c0_i32_1 = arith.constant 0 : i32
    return %c0_i32, %c0_i32_0 : i32, i32
  }
  func.func @transform_2(%arg0: i32) -> (i32, i32) {
    %c0_i32 = arith.constant 0 : i32
    %c0_i32_0 = arith.constant 0 : i32
    %c0_i32_1 = arith.constant 0 : i32
    return %c0_i32, %c0_i32_0 : i32, i32
  }
  func.func @transform_3(%arg0: i32) -> (i32, i32) {
    %c0_i32 = arith.constant 0 : i32
    %c0_i32_0 = arith.constant 0 : i32
    return %arg0, %c0_i32 : i32, i32
  }
}

</mosaic_0001>

<llo_original>
// kernel: residual_add.1
$region0: #{residual_add.1}
  #allocation0 [shape = 'u32[]', space=smem, size = 0x4, offset = 0x4, fixed_abs, tag = 'smem constant byte address 0x4 - core index']
  #allocation1 [shape = 'u32[144,128]{1,0:T(1,128)}', space=vmem, size = 0x12000, scoped, tag = 'internal scratch']
  %s0 = inlined_call_operand.vmem [shape: f32[16,128], index: 0, kind: input, shape index: {}]
  %s1 = inlined_call_operand.vmem [shape: bf16[128,128], index: 1, kind: input, shape index: {}]
  %s2 = inlined_call_operand.vmem [shape: f32[1,128], index: 2, kind: input, shape index: {}]
  %s3 = inlined_call_operand.vmem [shape: f32[16,128], index: 3, kind: output, shape index: {}]
  %s4 = sld [smem:[#allocation0]]
  $region22: #{residual_add.1} parent=0
    _
  %s6 = ssub.s32 1, %s4
  %s7 = scalar_select 0, %s6, %s4
  // Predicated region
  $region2: #{residual_add.1} parent=0 // pred_check
    _
  $region3: #{residual_add.1} parent=0 // pred_check_branch
    %9 = sbr.rel (0) target = $region5
  $region4: #{residual_add.1} parent=0 // pred_region
    _
  $region5: #{residual_add.1} parent=0 // pred_fallthru
    _
  // Predicated region
  $region6: #{residual_add.1} parent=0 // pred_check
    _
  $region7: #{residual_add.1} parent=0 // pred_check_branch
    %11 = sbr.rel (0) target = $region9
  $region8: #{residual_add.1} parent=0 // pred_region
    _
  $region9: #{residual_add.1} parent=0 // pred_fallthru
    _
  // Predicated region
  $region10: #{residual_add.1} parent=0 // pred_check
    _
  $region11: #{residual_add.1} parent=0 // pred_check_branch
    %13 = sbr.rel (0) target = $region13
  $region12: #{residual_add.1} parent=0 // pred_region
    _
  $region13: #{residual_add.1} parent=0 // pred_fallthru
    _
  %v15 = vld [vmem:[%s0] sm:$0xff]
  %v16 = vld [vmem:[%s0 + $0x8] sm:$0xff]
  %v17 = vpack.c.bf16 %v16, %v15
  %v18 = vld [vmem:[%s1] sm:$0xf]
  %v19 = vld [vmem:[%s1 + $0x4] sm:$0xf]
  %v20 = vld [vmem:[%s1 + $0x8] sm:$0xf]
  %v21 = vld [vmem:[%s1 + $0xc] sm:$0xf]
  %v22 = vld [vmem:[%s1 + $0x10] sm:$0xf]
  %v23 = vld [vmem:[%s1 + $0x14] sm:$0xf]
  %v24 = vld [vmem:[%s1 + $0x18] sm:$0xf]
  %v25 = vld [vmem:[%s1 + $0x1c] sm:$0xf]
  %v26 = vld [vmem:[%s1 + $0x20] sm:$0xf]
  %v27 = vld [vmem:[%s1 + $0x24] sm:$0xf]
  %v28 = vld [vmem:[%s1 + $0x28] sm:$0xf]
  %v29 = vld [vmem:[%s1 + $0x2c] sm:$0xf]
  %v30 = vld [vmem:[%s1 + $0x30] sm:$0xf]
  %v31 = vld [vmem:[%s1 + $0x34] sm:$0xf]
  %v32 = vld [vmem:[%s1 + $0x38] sm:$0xf]
  %v33 = vld [vmem:[%s1 + $0x3c] sm:$0xf]
  %v34 = vld [vmem:[%s2] sm:$0x1]
  %v36 = vlaneseq
  %v37 = vshrl.u32 %v36, 7
  %v38 = vsub.s32 0, %v37
  %v39 = vrot.slane %v34, %v38
  %v57 = vunpack.c.l.b16 %v18
  %v58 = vunpack.c.l.b16 %v19
  %v59 = vunpack.c.l.b16 %v20
  %v60 = vunpack.c.l.b16 %v21
  %v61 = vunpack.c.l.b16 %v22
  %v62 = vunpack.c.l.b16 %v23
  %v63 = vunpack.c.l.b16 %v24
  %v64 = vunpack.c.l.b16 %v25
  %v65 = vunpack.c.l.b16 %v26
  %v66 = vunpack.c.l.b16 %v27
  %v67 = vunpack.c.l.b16 %v28
  %v68 = vunpack.c.l.b16 %v29
  %v69 = vunpack.c.l.b16 %v30
  %v70 = vunpack.c.l.b16 %v31
  %v71 = vunpack.c.l.b16 %v32
  %v72 = vunpack.c.l.b16 %v33
  %v73 = vpack.c.b16 %v58, %v57
  %v74 = vpack.c.b16 %v60, %v59
  %v75 = vpack.c.b16 %v62, %v61
  %v76 = vpack.c.b16 %v64, %v63
  %v77 = vpack.c.b16 %v66, %v65
  %v78 = vpack.c.b16 %v68, %v67
  %v79 = vpack.c.b16 %v70, %v69
  %v80 = vpack.c.b16 %v72, %v71
  %89 = vmatprep.subr.bf16.mxu0 0
  %90 = vmatpush1.bf16.msra.mxu0 %v80
  %91 = vmatprep.subr.bf16.mxu0 0
  %92 = vmatpush1.bf16.msra.mxu0 %v79
  %93 = vmatprep.subr.bf16.mxu0 0
  %94 = vmatpush1.bf16.msra.mxu0 %v78
  %95 = vmatprep.subr.bf16.mxu0 0
  %96 = vmatpush1.bf16.msra.mxu0 %v77
  %97 = vmatprep.subr.bf16.mxu0 0
  %98 = vmatpush1.bf16.msra.mxu0 %v76
  %99 = vmatprep.subr.bf16.mxu0 0
  %100 = vmatpush1.bf16.msra.mxu0 %v75
  %101 = vmatprep.subr.bf16.mxu0 0
  %102 = vmatpush1.bf16.msra.mxu0 %v74
  %103 = vmatprep.subr.bf16.mxu0 0
  %104 = vmatpush1.bf16.msra.mxu0 %v73
  %105 = vmatprep.subr.bf16.mxu0 0
  %106 = vmatpush2.bf16.msra.mxu0 0
  %107 = vmatprep.subr.bf16.mxu0 0
  %108 = vmatpush2.bf16.msra.mxu0 0
  %109 = vmatprep.subr.bf16.mxu0 0
  %110 = vmatpush2.bf16.msra.mxu0 0
  %111 = vmatprep.subr.bf16.mxu0 0
  %112 = vmatpush2.bf16.msra.mxu0 0
  %113 = vmatprep.subr.bf16.mxu0 0
  %114 = vmatpush2.bf16.msra.mxu0 0
  %115 = vmatprep.subr.bf16.mxu0 0
  %116 = vmatpush2.bf16.msra.mxu0 0
  %117 = vmatprep.subr.bf16.mxu0 0
  %118 = vmatpush2.bf16.msra.mxu0 0
  %119 = vmatprep.subr.bf16.mxu0 0
  %120 = vmatpush2.bf16.msra.mxu0 0
  %121 = vmatprep.mubr.bf16.mxu0 0
  %122 = vmatmul.mubr.bf16.gmra.mxu0 %v17
  %v123 = vpop.f32.mrf.mxu0
  %v124 = vadd.f32 %v39, %v123
  %v125 = vpop.f32.mrf.mxu0
  %v126 = vpop.f32.mrf.mxu0
  %v127 = vadd.f32 %v39, %v126
  %v128 = vpop.f32.mrf.mxu0
  %129 = vdwg.mxu0
  %v130 = vadd.f32 %v124, %v15
  %v131 = vadd.f32 %v127, %v16
  %132 = vst [vmem:[%s3] sm:$0xff] %v130
  %133 = vst [vmem:[%s3 + $0x8] sm:$0xff] %v131
  // Predicated region
  $region14: #{residual_add.1} parent=0 // pred_check
    _
  $region15: #{residual_add.1} parent=0 // pred_check_branch
    %135 = sbr.rel (0) target = $region17
  $region16: #{residual_add.1} parent=0 // pred_region
    _
  $region17: #{residual_add.1} parent=0 // pred_fallthru
    _
  // Predicated region
  $region18: #{residual_add.1} parent=0 // pred_check
    _
  $region19: #{residual_add.1} parent=0 // pred_check_branch
    %137 = sbr.rel (0) target = $region21
  $region20: #{residual_add.1} parent=0 // pred_region
    _
  $region21: #{residual_add.1} parent=0 // pred_fallthru
    _

</llo_original>
